<compile_context>
chip_gen: v7x
topology: tpu7x:2x2x1
jax: 0.10.0
libtpu: 0.0.40
codegen_flags: <defaults>
</compile_context>

<pallas_src>
import functools

import jax
import jax.numpy as jnp
from jax import lax
from jax.experimental import pallas as pl
from jax.experimental.pallas import tpu as pltpu


def _pick_tile(n: int, cap: int = 256) -> int:
    """Largest MXU-friendly tile (multiple of 8, <= cap) that divides n, else n itself."""
    for t in (256, 128, 64, 32, 16, 8):
        if t <= cap and n % t == 0:
            return t
    return n  # tiny / odd batch: single block along this axis (full-dim exemption)


def _clip_loss_kernel(scale_ref, img_ref, txt_ref, out_ref,
                      m_row, l_row, col_m, col_l, acc_ref, *, n_total):
    i = pl.program_id(0)          # image (row) block
    j = pl.program_id(1)          # text  (column) block — reduction axis for rows
    ni = pl.num_programs(0)
    nj = pl.num_programs(1)

    # ---- init global scalar accumulators: [sum row-LSE, sum col-LSE, sum diag] ----
    @pl.when(jnp.logical_and(i == 0, j == 0))
    def _():
        acc_ref[0] = jnp.float32(0.0)
        acc_ref[1] = jnp.float32(0.0)
        acc_ref[2] = jnp.float32(0.0)

    # ---- init per-row-block online-LSE state ----
    @pl.when(j == 0)
    def _():
        m_row[...] = jnp.full_like(m_row, -jnp.inf)
        l_row[...] = jnp.zeros_like(l_row)

    # ---- init per-column-block online-LSE state (first visit is at i == 0) ----
    @pl.when(i == 0)
    def _():
        col_m[j] = jnp.full(col_m.shape[1:], -jnp.inf, jnp.float32)
        col_l[j] = jnp.zeros(col_l.shape[1:], jnp.float32)

    # ---- (TM, TN) logits tile: MXU matmul in native dtype, f32 accumulation ----
    scale = scale_ref[0]
    s = lax.dot_general(img_ref[...], txt_ref[...],
                        dimension_numbers=(((1,), (1,)), ((), ())),
                        preferred_element_type=jnp.float32)
    s = s * scale                                     # f32 tile scaling (see header)

    # ---- image-side (row) online logsumexp ----
    m_new = jnp.maximum(m_row[...], jnp.max(s, axis=1, keepdims=True))   # (TM, 1)
    l_row[...] = (l_row[...] * jnp.exp(m_row[...] - m_new)
                  + jnp.sum(jnp.exp(s - m_new), axis=1, keepdims=True))
    m_row[...] = m_new

    # ---- text-side (column) online logsumexp ----
    cm_old = col_m[j]                                                    # (1, TN)
    cl_old = col_l[j]
    cm_new = jnp.maximum(cm_old, jnp.max(s, axis=0, keepdims=True))
    col_l[j] = (cl_old * jnp.exp(cm_old - cm_new)
                + jnp.sum(jnp.exp(s - cm_new), axis=0, keepdims=True))
    col_m[j] = cm_new

    # ---- diagonal (labels = arange(N)) lives only in the i == j tile (TM == TN) ----
    @pl.when(i == j)
    def _():
        ri = lax.broadcasted_iota(jnp.int32, s.shape, 0)
        ci = lax.broadcasted_iota(jnp.int32, s.shape, 1)
        acc_ref[2] += jnp.sum(jnp.where(ri == ci, s, 0.0))

    # ---- finalize row block i once all column tiles have been seen ----
    @pl.when(j == nj - 1)
    def _():
        acc_ref[0] += jnp.sum(m_row[...] + jnp.log(l_row[...]))

    # ---- finalize column block j once all row tiles have been seen ----
    @pl.when(i == ni - 1)
    def _():
        acc_ref[1] += jnp.sum(col_m[j] + jnp.log(col_l[j]))

    # ---- emit the three scalar losses at the very last grid step ----
    @pl.when(jnp.logical_and(i == ni - 1, j == nj - 1))
    def _():
        inv_n = jnp.float32(1.0 / n_total)
        diag = acc_ref[2]
        image_loss = (acc_ref[0] - diag) * inv_n
        text_loss = (acc_ref[1] - diag) * inv_n
        out_ref[0] = 0.5 * (image_loss + text_loss)
        out_ref[1] = image_loss
        out_ref[2] = text_loss


def clip_loss(image_features, text_features, logit_scale, *, max_tile=256):
    """Returns (total_loss, image_loss, text_loss), each a scalar f32."""
    n, d = image_features.shape
    assert text_features.shape == (n, d), (image_features.shape, text_features.shape)

    tm = _pick_tile(n, cap=max_tile)
    tn = tm                      # square tiles so the label diagonal is in the i == j tiles
    ni = n // tm
    nj = n // tn

    scale = jnp.asarray(logit_scale, jnp.float32).reshape((1,))
    kernel = functools.partial(_clip_loss_kernel, n_total=n)

    itemsize = jnp.dtype(image_features.dtype).itemsize
    cost = pl.CostEstimate(
        flops=2 * n * n * d + 8 * n * n,          # matmul tiles + softmax elementwise
        transcendentals=2 * n * n + 2 * n,        # row + column exp passes, final logs
        bytes_accessed=(n * d + ni * n * d) * itemsize + 3 * 4,
    )

    out = pl.pallas_call(
        kernel,
        out_shape=jax.ShapeDtypeStruct((3,), jnp.float32),
        grid_spec=pltpu.PrefetchScalarGridSpec(
            num_scalar_prefetch=0,
            grid=(ni, nj),
            in_specs=[
                pl.BlockSpec(memory_space=pltpu.SMEM),               # logit_scale (1,)
                pl.BlockSpec((tm, d), lambda i, j: (i, 0)),          # image tile
                pl.BlockSpec((tn, d), lambda i, j: (j, 0)),          # text tile
            ],
            out_specs=pl.BlockSpec(memory_space=pltpu.SMEM),         # (3,) scalar losses
            scratch_shapes=[
                pltpu.VMEM((tm, 1), jnp.float32),                    # m_row (running max)
                pltpu.VMEM((tm, 1), jnp.float32),                    # l_row (running sum)
                pltpu.VMEM((nj, 1, tn), jnp.float32),                # col_m (running max)
                pltpu.VMEM((nj, 1, tn), jnp.float32),                # col_l (running sum)
                pltpu.SMEM((3,), jnp.float32),                       # scalar accumulators
            ],
        ),
        compiler_params=pltpu.CompilerParams(
            # Both axes carry state (column accumulator / scalar sums) -> "arbitrary".
            dimension_semantics=("arbitrary", "arbitrary"),
            vmem_limit_bytes=32 * 1024 * 1024,
        ),
        cost_estimate=cost,
    )(scale, image_features, text_features)
    return out[0], out[1], out[2]


def _reference(image_features, text_features, logit_scale):
    # Pure-JAX reference of the PyTorch forward (world_size=1).
    hi = lax.Precision.HIGHEST
    logits_per_image = logit_scale * jnp.matmul(image_features, text_features.T, precision=hi)
    logits_per_text = logit_scale * jnp.matmul(text_features, image_features.T, precision=hi)

    def ce(logits):
        logits = logits.astype(jnp.float32)
        lse = jax.scipy.special.logsumexp(logits, axis=1)
        tgt = jnp.diagonal(logits)
        return jnp.mean(lse - tgt)

    image_loss = ce(logits_per_image)
    text_loss = ce(logits_per_text)
    return 0.5 * (image_loss + text_loss), image_loss, text_loss


if __name__ == "__main__":
    def run_case(n, d):
        key = jax.random.PRNGKey(0)
        k_img, k_txt = jax.random.split(key)
        img = jax.random.normal(k_img, (n, d), dtype=jnp.float32)
        txt = jax.random.normal(k_txt, (n, d), dtype=jnp.float32)
        # CLIP L2-normalizes features before this loss; do the same for realism.
        img = img / jnp.linalg.norm(img, axis=-1, keepdims=True)
        txt = txt / jnp.linalg.norm(txt, axis=-1, keepdims=True)
        # logit_scale = exp(log(1/0.07)), the standard CLIP init (deterministic).
        logit_scale = jnp.float32(1.0 / 0.07)

        total, img_loss, txt_loss = clip_loss(img, txt, logit_scale)
        jax.block_until_ready((total, img_loss, txt_loss))

        ref_total, ref_img, ref_txt = _reference(img, txt, logit_scale)
        assert jnp.allclose(total, ref_total, atol=1e-3, rtol=1e-4), (n, d, total, ref_total)
        assert jnp.allclose(img_loss, ref_img, atol=1e-3, rtol=1e-4), (n, d, img_loss, ref_img)
        assert jnp.allclose(txt_loss, ref_txt, atol=1e-3, rtol=1e-4), (n, d, txt_loss, ref_txt)

    run_case(8, 32)     # tiny batch: single (8, 8) tile, exercises the degenerate grid
    run_case(384, 64)   # multi-tile path: 3x3 grid of 128x128 logits tiles (online LSE,
                        # column accumulator indexing, diag gating, finalization)
    print("KERNEL_OK")
</pallas_src>

<mosaic_0001>
module attributes {stable_mosaic.version = 11 : i64} {
  func.func @_clip_loss_kernel(%arg0: i32, %arg1: i32, %arg2: memref<1xf32, #tpu.memory_space<smem>>, %arg3: memref<8x32xf32, #tpu.memory_space<vmem>>, %arg4: memref<8x32xf32, #tpu.memory_space<vmem>>, %arg5: memref<3xf32, #tpu.memory_space<smem>>, %arg6: memref<8x1xf32, #tpu.memory_space<vmem>>, %arg7: memref<8x1xf32, #tpu.memory_space<vmem>>, %arg8: memref<1x1x8xf32, #tpu.memory_space<vmem>>, %arg9: memref<1x1x8xf32, #tpu.memory_space<vmem>>, %arg10: memref<3xf32, #tpu.memory_space<smem>>) attributes {dimension_semantics = [#tpu.dimension_semantics<arbitrary>, #tpu.dimension_semantics<arbitrary>], iteration_bounds = array<i64: 1, 1>, scalar_prefetch = 0 : i64, scratch_operands = 5 : i64, tpu.core_type = #tpu.core_type<tc>, window_params = [{transform_indices = @transform_0, window_bounds = array<i64: 1>}, {transform_indices = @transform_1, window_bounds = array<i64: 8, 32>}, {transform_indices = @transform_2, window_bounds = array<i64: 8, 32>}, {transform_indices = @transform_3, window_bounds = array<i64: 3>}]} {
    %c0_i32 = arith.constant 0 : i32
    %0 = arith.cmpi eq, %arg0, %c0_i32 : i32
    %c0_i32_0 = arith.constant 0 : i32
    %1 = arith.cmpi eq, %arg1, %c0_i32_0 : i32
    %2 = arith.andi %0, %1 : i1
    %3 = arith.extui %2 : i1 to i32
    %c0_i32_1 = arith.constant 0 : i32
    %4 = arith.cmpi ne, %3, %c0_i32_1 : i32
    scf.if %4 {
      %cst_40 = arith.constant 0.000000e+00 : f32
      %c0_41 = arith.constant 0 : index
      %74 = memref.load %arg10[%c0_41] : memref<3xf32, #tpu.memory_space<smem>>
      memref.store %cst_40, %arg10[%c0_41] : memref<3xf32, #tpu.memory_space<smem>>
      %cst_42 = arith.constant 0.000000e+00 : f32
      %c1 = arith.constant 1 : index
      %75 = memref.load %arg10[%c1] : memref<3xf32, #tpu.memory_space<smem>>
      memref.store %cst_42, %arg10[%c1] : memref<3xf32, #tpu.memory_space<smem>>
      %cst_43 = arith.constant 0.000000e+00 : f32
      %c2 = arith.constant 2 : index
      %76 = memref.load %arg10[%c2] : memref<3xf32, #tpu.memory_space<smem>>
      memref.store %cst_43, %arg10[%c2] : memref<3xf32, #tpu.memory_space<smem>>
    } else {
    }
    %c0_i32_2 = arith.constant 0 : i32
    %5 = arith.cmpi eq, %arg1, %c0_i32_2 : i32
    %6 = arith.extui %5 : i1 to i32
    %c0_i32_3 = arith.constant 0 : i32
    %7 = arith.cmpi ne, %6, %c0_i32_3 : i32
    scf.if %7 {
      %cst_40 = arith.constant 0xFF800000 : f32
      %74 = vector.broadcast %cst_40 : f32 to vector<8x1xf32>
      %c0_41 = arith.constant 0 : index
      %c0_42 = arith.constant 0 : index
      %75 = vector.load %arg6[%c0_41, %c0_42] : memref<8x1xf32, #tpu.memory_space<vmem>>, vector<8x1xf32>
      tpu.vector_store %arg6[%c0_41, %c0_42], %74 {strides = array<i32>} : memref<8x1xf32, #tpu.memory_space<vmem>>, vector<8x1xf32>,
      %cst_43 = arith.constant 0.000000e+00 : f32
      %76 = vector.broadcast %cst_43 : f32 to vector<8x1xf32>
      %c0_44 = arith.constant 0 : index
      %c0_45 = arith.constant 0 : index
      %77 = vector.load %arg7[%c0_44, %c0_45] : memref<8x1xf32, #tpu.memory_space<vmem>>, vector<8x1xf32>
      tpu.vector_store %arg7[%c0_44, %c0_45], %76 {strides = array<i32>} : memref<8x1xf32, #tpu.memory_space<vmem>>, vector<8x1xf32>,
    } else {
    }
    %c0_i32_4 = arith.constant 0 : i32
    %8 = arith.cmpi eq, %arg0, %c0_i32_4 : i32
    %9 = arith.extui %8 : i1 to i32
    %c0_i32_5 = arith.constant 0 : i32
    %10 = arith.cmpi ne, %9, %c0_i32_5 : i32
    scf.if %10 {
      %cst_40 = arith.constant 0xFF800000 : f32
      %74 = vector.broadcast %cst_40 : f32 to vector<1x8xf32>
      %75 = arith.index_cast %arg1 : i32 to index
      %c0_41 = arith.constant 0 : index
      %c0_42 = arith.constant 0 : index
      %76 = vector.load %arg8[%75, %c0_41, %c0_42] : memref<1x1x8xf32, #tpu.memory_space<vmem>>, vector<1x1x8xf32>
      %77 = vector.shape_cast %76 : vector<1x1x8xf32> to vector<1x8xf32>
      %78 = vector.shape_cast %74 : vector<1x8xf32> to vector<1x1x8xf32>
      tpu.vector_store %arg8[%75, %c0_41, %c0_42], %78 {strides = array<i32>} : memref<1x1x8xf32, #tpu.memory_space<vmem>>, vector<1x1x8xf32>,
      %cst_43 = arith.constant 0.000000e+00 : f32
      %79 = vector.broadcast %cst_43 : f32 to vector<1x8xf32>
      %80 = arith.index_cast %arg1 : i32 to index
      %c0_44 = arith.constant 0 : index
      %c0_45 = arith.constant 0 : index
      %81 = vector.load %arg9[%80, %c0_44, %c0_45] : memref<1x1x8xf32, #tpu.memory_space<vmem>>, vector<1x1x8xf32>
      %82 = vector.shape_cast %81 : vector<1x1x8xf32> to vector<1x8xf32>
      %83 = vector.shape_cast %79 : vector<1x8xf32> to vector<1x1x8xf32>
      tpu.vector_store %arg9[%80, %c0_44, %c0_45], %83 {strides = array<i32>} : memref<1x1x8xf32, #tpu.memory_space<vmem>>, vector<1x1x8xf32>,
    } else {
    }
    %c0 = arith.constant 0 : index
    %11 = memref.load %arg2[%c0] : memref<1xf32, #tpu.memory_space<smem>>
    %c0_6 = arith.constant 0 : index
    %c0_7 = arith.constant 0 : index
    %12 = vector.load %arg3[%c0_6, %c0_7] : memref<8x32xf32, #tpu.memory_space<vmem>>, vector<8x32xf32>
    %c0_8 = arith.constant 0 : index
    %c0_9 = arith.constant 0 : index
    %13 = vector.load %arg4[%c0_8, %c0_9] : memref<8x32xf32, #tpu.memory_space<vmem>>, vector<8x32xf32>
    %cst = arith.constant dense<0.000000e+00> : vector<8x8xf32>
    %14 = tpu.matmul %12, %13, %cst {dimension_numbers = #tpu.dot_dimension_numbers<[1], [1], [0], [0], [0, 0, 1, 0], [], []>} : vector<8x32xf32>, vector<8x32xf32>, vector<8x8xf32> -> vector<8x8xf32>
    %15 = vector.broadcast %11 : f32 to vector<8x8xf32>
    %16 = arith.mulf %14, %15 : vector<8x8xf32>
    %c0_10 = arith.constant 0 : index
    %c0_11 = arith.constant 0 : index
    %17 = vector.load %arg6[%c0_10, %c0_11] : memref<8x1xf32, #tpu.memory_space<vmem>>, vector<8x1xf32>
    %cst_12 = arith.constant dense<0xFF800000> : vector<8xf32>
    %18 = vector.multi_reduction <maximumf>, %16, %cst_12 [1] : vector<8x8xf32> to vector<8xf32>
    %19 = vector.shape_cast %18 : vector<8xf32> to vector<8x1xf32>
    %20 = arith.maximumf %17, %19 : vector<8x1xf32>
    %c0_13 = arith.constant 0 : index
    %c0_14 = arith.constant 0 : index
    %21 = vector.load %arg7[%c0_13, %c0_14] : memref<8x1xf32, #tpu.memory_space<vmem>>, vector<8x1xf32>
    %c0_15 = arith.constant 0 : index
    %c0_16 = arith.constant 0 : index
    %22 = vector.load %arg6[%c0_15, %c0_16] : memref<8x1xf32, #tpu.memory_space<vmem>>, vector<8x1xf32>
    %23 = arith.subf %22, %20 : vector<8x1xf32>
    %24 = math.exp %23 : vector<8x1xf32>
    %25 = arith.mulf %21, %24 : vector<8x1xf32>
    %26 = vector.broadcast %20 : vector<8x1xf32> to vector<8x8xf32>
    %27 = arith.subf %16, %26 : vector<8x8xf32>
    %28 = math.exp %27 : vector<8x8xf32>
    %cst_17 = arith.constant dense<0.000000e+00> : vector<8xf32>
    %29 = vector.multi_reduction <add>, %28, %cst_17 [1] : vector<8x8xf32> to vector<8xf32>
    %30 = vector.shape_cast %29 : vector<8xf32> to vector<8x1xf32>
    %31 = arith.addf %25, %30 : vector<8x1xf32>
    %c0_18 = arith.constant 0 : index
    %c0_19 = arith.constant 0 : index
    %32 = vector.load %arg7[%c0_18, %c0_19] : memref<8x1xf32, #tpu.memory_space<vmem>>, vector<8x1xf32>
    tpu.vector_store %arg7[%c0_18, %c0_19], %31 {strides = array<i32>} : memref<8x1xf32, #tpu.memory_space<vmem>>, vector<8x1xf32>,
    %c0_20 = arith.constant 0 : index
    %c0_21 = arith.constant 0 : index
    %33 = vector.load %arg6[%c0_20, %c0_21] : memref<8x1xf32, #tpu.memory_space<vmem>>, vector<8x1xf32>
    tpu.vector_store %arg6[%c0_20, %c0_21], %20 {strides = array<i32>} : memref<8x1xf32, #tpu.memory_space<vmem>>, vector<8x1xf32>,
    %34 = arith.index_cast %arg1 : i32 to index
    %c0_22 = arith.constant 0 : index
    %c0_23 = arith.constant 0 : index
    %35 = vector.load %arg8[%34, %c0_22, %c0_23] : memref<1x1x8xf32, #tpu.memory_space<vmem>>, vector<1x1x8xf32>
    %36 = vector.shape_cast %35 : vector<1x1x8xf32> to vector<1x8xf32>
    %37 = arith.index_cast %arg1 : i32 to index
    %c0_24 = arith.constant 0 : index
    %c0_25 = arith.constant 0 : index
    %38 = vector.load %arg9[%37, %c0_24, %c0_25] : memref<1x1x8xf32, #tpu.memory_space<vmem>>, vector<1x1x8xf32>
    %39 = vector.shape_cast %38 : vector<1x1x8xf32> to vector<1x8xf32>
    %cst_26 = arith.constant dense<0xFF800000> : vector<8xf32>
    %40 = vector.multi_reduction <maximumf>, %16, %cst_26 [0] : vector<8x8xf32> to vector<8xf32>
    %41 = vector.shape_cast %40 : vector<8xf32> to vector<1x8xf32>
    %42 = arith.maximumf %36, %41 : vector<1x8xf32>
    %43 = arith.subf %36, %42 : vector<1x8xf32>
    %44 = math.exp %43 : vector<1x8xf32>
    %45 = arith.mulf %39, %44 : vector<1x8xf32>
    %46 = vector.broadcast %42 : vector<1x8xf32> to vector<8x8xf32>
    %47 = arith.subf %16, %46 : vector<8x8xf32>
    %48 = math.exp %47 : vector<8x8xf32>
    %cst_27 = arith.constant dense<0.000000e+00> : vector<8xf32>
    %49 = vector.multi_reduction <add>, %48, %cst_27 [0] : vector<8x8xf32> to vector<8xf32>
    %50 = vector.shape_cast %49 : vector<8xf32> to vector<1x8xf32>
    %51 = arith.addf %45, %50 : vector<1x8xf32>
    %52 = arith.index_cast %arg1 : i32 to index
    %c0_28 = arith.constant 0 : index
    %c0_29 = arith.constant 0 : index
    %53 = vector.load %arg9[%52, %c0_28, %c0_29] : memref<1x1x8xf32, #tpu.memory_space<vmem>>, vector<1x1x8xf32>
    %54 = vector.shape_cast %53 : vector<1x1x8xf32> to vector<1x8xf32>
    %55 = vector.shape_cast %51 : vector<1x8xf32> to vector<1x1x8xf32>
    tpu.vector_store %arg9[%52, %c0_28, %c0_29], %55 {strides = array<i32>} : memref<1x1x8xf32, #tpu.memory_space<vmem>>, vector<1x1x8xf32>,
    %56 = arith.index_cast %arg1 : i32 to index
    %c0_30 = arith.constant 0 : index
    %c0_31 = arith.constant 0 : index
    %57 = vector.load %arg8[%56, %c0_30, %c0_31] : memref<1x1x8xf32, #tpu.memory_space<vmem>>, vector<1x1x8xf32>
    %58 = vector.shape_cast %57 : vector<1x1x8xf32> to vector<1x8xf32>
    %59 = vector.shape_cast %42 : vector<1x8xf32> to vector<1x1x8xf32>
    tpu.vector_store %arg8[%56, %c0_30, %c0_31], %59 {strides = array<i32>} : memref<1x1x8xf32, #tpu.memory_space<vmem>>, vector<1x1x8xf32>,
    %60 = arith.cmpi eq, %arg0, %arg1 : i32
    %61 = arith.extui %60 : i1 to i32
    %c0_i32_32 = arith.constant 0 : i32
    %62 = arith.cmpi ne, %61, %c0_i32_32 : i32
    scf.if %62 {
      %74 = tpu.iota {dimensions = array<i32: 0>} : vector<8x8xi32>
      %75 = tpu.iota {dimensions = array<i32: 1>} : vector<8x8xi32>
      %c2 = arith.constant 2 : index
      %76 = memref.load %arg10[%c2] : memref<3xf32, #tpu.memory_space<smem>>
      %77 = arith.cmpi eq, %74, %75 : vector<8x8xi32>
      %cst_40 = arith.constant 0.000000e+00 : f32
      %78 = vector.broadcast %cst_40 : f32 to vector<8x8xf32>
      %79 = arith.select %77, %16, %78 : vector<8x8xi1>, vector<8x8xf32>
      %80 = vector.shape_cast %79 : vector<8x8xf32> to vector<1x8x8xf32>
      %cst_41 = arith.constant dense<0.000000e+00> : vector<1xf32>
      %81 = vector.multi_reduction <add>, %80, %cst_41 [1, 2] : vector<1x8x8xf32> to vector<1xf32>
      %82 = vector.shape_cast %81 : vector<1xf32> to vector<1x1x1xf32>
      %83 = vector.extract %82[0, 0, 0] : f32 from vector<1x1x1xf32>
      %84 = arith.addf %76, %83 : f32
      %c2_42 = arith.constant 2 : index
      %85 = memref.load %arg10[%c2_42] : memref<3xf32, #tpu.memory_space<smem>>
      memref.store %84, %arg10[%c2_42] : memref<3xf32, #tpu.memory_space<smem>>
    } else {
    }
    %c0_i32_33 = arith.constant 0 : i32
    %63 = arith.cmpi eq, %arg1, %c0_i32_33 : i32
    %64 = arith.extui %63 : i1 to i32
    %c0_i32_34 = arith.constant 0 : i32
    %65 = arith.cmpi ne, %64, %c0_i32_34 : i32
    scf.if %65 {
      %c0_40 = arith.constant 0 : index
      %74 = memref.load %arg10[%c0_40] : memref<3xf32, #tpu.memory_space<smem>>
      %c0_41 = arith.constant 0 : index
      %c0_42 = arith.constant 0 : index
      %75 = vector.load %arg6[%c0_41, %c0_42] : memref<8x1xf32, #tpu.memory_space<vmem>>, vector<8x1xf32>
      %c0_43 = arith.constant 0 : index
      %c0_44 = arith.constant 0 : index
      %76 = vector.load %arg7[%c0_43, %c0_44] : memref<8x1xf32, #tpu.memory_space<vmem>>, vector<8x1xf32>
      %77 = math.log %76 : vector<8x1xf32>
      %78 = arith.addf %75, %77 : vector<8x1xf32>
      %79 = vector.shape_cast %78 : vector<8x1xf32> to vector<1x8x1xf32>
      %cst_45 = arith.constant dense<0.000000e+00> : vector<1xf32>
      %80 = vector.multi_reduction <add>, %79, %cst_45 [1, 2] : vector<1x8x1xf32> to vector<1xf32>
      %81 = vector.shape_cast %80 : vector<1xf32> to vector<1x1x1xf32>
      %82 = vector.extract %81[0, 0, 0] : f32 from vector<1x1x1xf32>
      %83 = arith.addf %74, %82 : f32
      %c0_46 = arith.constant 0 : index
      %84 = memref.load %arg10[%c0_46] : memref<3xf32, #tpu.memory_space<smem>>
      memref.store %83, %arg10[%c0_46] : memref<3xf32, #tpu.memory_space<smem>>
    } else {
    }
    %c0_i32_35 = arith.constant 0 : i32
    %66 = arith.cmpi eq, %arg0, %c0_i32_35 : i32
    %67 = arith.extui %66 : i1 to i32
    %c0_i32_36 = arith.constant 0 : i32
    %68 = arith.cmpi ne, %67, %c0_i32_36 : i32
    scf.if %68 {
      %c1 = arith.constant 1 : index
      %74 = memref.load %arg10[%c1] : memref<3xf32, #tpu.memory_space<smem>>
      %75 = arith.index_cast %arg1 : i32 to index
      %c0_40 = arith.constant 0 : index
      %c0_41 = arith.constant 0 : index
      %76 = vector.load %arg8[%75, %c0_40, %c0_41] : memref<1x1x8xf32, #tpu.memory_space<vmem>>, vector<1x1x8xf32>
      %77 = vector.shape_cast %76 : vector<1x1x8xf32> to vector<1x8xf32>
      %78 = arith.index_cast %arg1 : i32 to index
      %c0_42 = arith.constant 0 : index
      %c0_43 = arith.constant 0 : index
      %79 = vector.load %arg9[%78, %c0_42, %c0_43] : memref<1x1x8xf32, #tpu.memory_space<vmem>>, vector<1x1x8xf32>
      %80 = vector.shape_cast %79 : vector<1x1x8xf32> to vector<1x8xf32>
      %81 = math.log %80 : vector<1x8xf32>
      %82 = arith.addf %77, %81 : vector<1x8xf32>
      %83 = vector.shape_cast %82 : vector<1x8xf32> to vector<1x1x8xf32>
      %cst_44 = arith.constant dense<0.000000e+00> : vector<1xf32>
      %84 = vector.multi_reduction <add>, %83, %cst_44 [1, 2] : vector<1x1x8xf32> to vector<1xf32>
      %85 = vector.shape_cast %84 : vector<1xf32> to vector<1x1x1xf32>
      %86 = vector.extract %85[0, 0, 0] : f32 from vector<1x1x1xf32>
      %87 = arith.addf %74, %86 : f32
      %c1_45 = arith.constant 1 : index
      %88 = memref.load %arg10[%c1_45] : memref<3xf32, #tpu.memory_space<smem>>
      memref.store %87, %arg10[%c1_45] : memref<3xf32, #tpu.memory_space<smem>>
    } else {
    }
    %c0_i32_37 = arith.constant 0 : i32
    %69 = arith.cmpi eq, %arg0, %c0_i32_37 : i32
    %c0_i32_38 = arith.constant 0 : i32
    %70 = arith.cmpi eq, %arg1, %c0_i32_38 : i32
    %71 = arith.andi %69, %70 : i1
    %72 = arith.extui %71 : i1 to i32
    %c0_i32_39 = arith.constant 0 : i32
    %73 = arith.cmpi ne, %72, %c0_i32_39 : i32
    scf.if %73 {
      %c2 = arith.constant 2 : index
      %74 = memref.load %arg10[%c2] : memref<3xf32, #tpu.memory_space<smem>>
      %c0_40 = arith.constant 0 : index
      %75 = memref.load %arg10[%c0_40] : memref<3xf32, #tpu.memory_space<smem>>
      %76 = arith.subf %75, %74 : f32
      %cst_41 = arith.constant 1.250000e-01 : f32
      %77 = arith.mulf %76, %cst_41 : f32
      %c1 = arith.constant 1 : index
      %78 = memref.load %arg10[%c1] : memref<3xf32, #tpu.memory_space<smem>>
      %79 = arith.subf %78, %74 : f32
      %cst_42 = arith.constant 1.250000e-01 : f32
      %80 = arith.mulf %79, %cst_42 : f32
      %81 = arith.addf %77, %80 : f32
      %cst_43 = arith.constant 5.000000e-01 : f32
      %82 = arith.mulf %cst_43, %81 : f32
      %c0_44 = arith.constant 0 : index
      %83 = memref.load %arg5[%c0_44] : memref<3xf32, #tpu.memory_space<smem>>
      memref.store %82, %arg5[%c0_44] : memref<3xf32, #tpu.memory_space<smem>>
      %c1_45 = arith.constant 1 : index
      %84 = memref.load %arg5[%c1_45] : memref<3xf32, #tpu.memory_space<smem>>
      memref.store %77, %arg5[%c1_45] : memref<3xf32, #tpu.memory_space<smem>>
      %c2_46 = arith.constant 2 : index
      %85 = memref.load %arg5[%c2_46] : memref<3xf32, #tpu.memory_space<smem>>
      memref.store %80, %arg5[%c2_46] : memref<3xf32, #tpu.memory_space<smem>>
    } else {
    }
    return
  }
  func.func @transform_0(%arg0: i32, %arg1: i32) -> i32 {
    %c0_i32 = arith.constant 0 : i32
    %c0_i32_0 = arith.constant 0 : i32
    return %c0_i32 : i32
  }
  func.func @transform_1(%arg0: i32, %arg1: i32) -> (i32, i32) {
    %c0_i32 = arith.constant 0 : i32
    %c0_i32_0 = arith.constant 0 : i32
    return %arg0, %c0_i32 : i32, i32
  }
  func.func @transform_2(%arg0: i32, %arg1: i32) -> (i32, i32) {
    %c0_i32 = arith.constant 0 : i32
    %c0_i32_0 = arith.constant 0 : i32
    return %arg1, %c0_i32 : i32, i32
  }
  func.func @transform_3(%arg0: i32, %arg1: i32) -> i32 {
    %c0_i32 = arith.constant 0 : i32
    %c0_i32_0 = arith.constant 0 : i32
    return %c0_i32 : i32
  }
}

</mosaic_0001>

<llo_original>
// kernel: tpu_custom_call.1
$region0: #{tpu_custom_call.1}
  #allocation0 [shape = 'u32[]', space=smem, size = 0x4, offset = 0x4, fixed_abs, tag = 'smem constant byte address 0x4 - core index']
  #allocation1 [shape = 'u32[144,128]{1,0:T(1,128)}', space=vmem, size = 0x12000, scoped, tag = 'internal scratch']
  #allocation2 [shape = 'f32[8,1]{1,0:T(8,128)}', space=vmem, size = 0x1000, scoped, tag = 'scratch operand']
  #allocation3 [shape = 'f32[8,1]{1,0:T(8,128)}', space=vmem, size = 0x1000, scoped, tag = 'scratch operand']
  #allocation4 [shape = 'f32[1,1,8]{2,1,0:T(1,128)}', space=vmem, size = 0x200, scoped, tag = 'scratch operand']
  #allocation5 [shape = 'f32[1,1,8]{2,1,0:T(1,128)}', space=vmem, size = 0x200, scoped, tag = 'scratch operand']
  #allocation6 [shape = 'f32[3]{0:T(128)}', space=smem, size = 0x200, scoped, tag = 'scratch operand']
  #allocation7 [shape = 'f32[1]{0:T(128)S(6)}', space=smem, size = 0x200, scoped, tag = 'scoped memory for tpu_custom_call.1']
  %s0 = inlined_call_operand.<no memory space> [shape: f32[1], index: 0, kind: input, shape index: {}]
  %s1 = inlined_call_operand.hbm [shape: f32[8,32], index: 1, kind: input, shape index: {}]
  %s2 = inlined_call_operand.hbm [shape: f32[8,32], index: 2, kind: input, shape index: {}]
  %s3 = inlined_call_operand.hbm [shape: f32[3], index: 3, kind: output, shape index: {}]
  %s4 = sld [smem:[#allocation0]]
  $region58: #{tpu_custom_call.1} parent=0
    _
  %s6 = ssub.s32 1, %s4
  %s7 = scalar_select 0, %s6, %s4
  %8 = sst [smem:[#allocation7]] %s0
  $region1: #{tpu_custom_call.1} parent=0
    #allocation8 [shape = 'u8[4096]{0}', space=vmem, size = 0x1000, scoped, tag = 'input window, operand 1, single buffered']
    #allocation9 [shape = 's32[1]{0}', space=sflag, size = 0x4, scoped, tag = 'scoped memory for tpu_custom_call.1']
    #allocation10 [shape = 's32[1]{0}', space=sflag, size = 0x4, scoped, tag = 'scoped memory for tpu_custom_call.1']
    #allocation11 [shape = 'u8[4096]{0}', space=vmem, size = 0x1000, scoped, tag = 'input window, operand 2, single buffered']
    #allocation12 [shape = 's32[1]{0}', space=sflag, size = 0x4, scoped, tag = 'scoped memory for tpu_custom_call.1']
    #allocation13 [shape = 'u8[512]{0}', space=smem, size = 0x200, scoped, tag = 'output window, operand 0, single buffered']
    %9 = vsyncpa [#allocation9], 0
    %10 = vsyncpa [#allocation12], 0
    %11 = vsyncpa [#allocation10], 0
    // Predicated region
    $region2: #{tpu_custom_call.1} parent=1 // pred_check
      _
    $region3: #{tpu_custom_call.1} parent=1 // pred_check_branch
      %13 = sbr.rel (0) target = $region5
    $region4: #{tpu_custom_call.1} parent=1 // pred_region
      _
    $region5: #{tpu_custom_call.1} parent=1 // pred_fallthru
      _
    // Predicated region
    $region6: #{tpu_custom_call.1} parent=1 // pred_check
      _
    $region7: #{tpu_custom_call.1} parent=1 // pred_check_branch
      %15 = sbr.rel (0) target = $region9
    $region8: #{tpu_custom_call.1} parent=1 // pred_region
      %s17 = ssub.s32 128, 128
      %18 = vsyncadd [#allocation9], %s17
      %s20 = sshll.u32 [#allocation8], 4
      %s21 = int_to_ptr.vmem [resolvable:$true] %s20
      %23 = dma.hbm_to_vmem [thread:$0]  %s1, 128, %s21, [#allocation9]
    $region9: #{tpu_custom_call.1} parent=1 // pred_fallthru
      _
    // Predicated region
    $region10: #{tpu_custom_call.1} parent=1 // pred_check
      _
    $region11: #{tpu_custom_call.1} parent=1 // pred_check_branch
      %25 = sbr.rel (0) target = $region13
    $region12: #{tpu_custom_call.1} parent=1 // pred_region
      %s27 = ssub.s32 128, 128
      %28 = vsyncadd [#allocation12], %s27
      %s30 = sshll.u32 [#allocation11], 4
      %s31 = int_to_ptr.vmem [resolvable:$true] %s30
      %33 = dma.hbm_to_vmem [thread:$0]  %s2, 128, %s31, [#allocation12]
    $region13: #{tpu_custom_call.1} parent=1 // pred_fallthru
      _
    // Predicated region
    $region14: #{tpu_custom_call.1} parent=1 // pred_check
      _
    $region15: #{tpu_custom_call.1} parent=1 // pred_check_branch
      %35 = sbr.rel (0) target = $region17
    $region16: #{tpu_custom_call.1} parent=1 // pred_region
      %36 = dma.done [#allocation9], 128
    $region17: #{tpu_custom_call.1} parent=1 // pred_fallthru
      _
    // Predicated region
    $region18: #{tpu_custom_call.1} parent=1 // pred_check
      _
    $region19: #{tpu_custom_call.1} parent=1 // pred_check_branch
      %38 = sbr.rel (0) target = $region21
    $region20: #{tpu_custom_call.1} parent=1 // pred_region
      %39 = dma.done [#allocation12], 128
    $region21: #{tpu_custom_call.1} parent=1 // pred_fallthru
      _
    %p40 = scmp.eq.s32.totalorder 0, 0
    %p41 = scmp.eq.s32.totalorder 0, 0
    %p42 = pnand %p40, %p41
    %p43 = pneg %p42
    // Predicated region
    $region22: #{tpu_custom_call.1} parent=1 // pred_check
      _
    $region23: #{tpu_custom_call.1} parent=1 // pred_check_branch
      %45 = sbr.rel (%p42) target = $region25
    $region24: #{tpu_custom_call.1} parent=1 // pred_region
      %s46 = scalar_lea.smem [#allocation6], 0
      %47 = sst [smem:[%s46]] 0.0
      %s48 = scalar_lea.smem [#allocation6], 1
      %49 = sst [smem:[%s48]] 0.0
      %s50 = scalar_lea.smem [#allocation6], 2
      %51 = sst [smem:[%s50]] 0.0
    $region25: #{tpu_custom_call.1} parent=1 // pred_fallthru
      _
    // Predicated region
    $region26: #{tpu_custom_call.1} parent=1 // pred_check
      %p52 = pneg %p41
    $region27: #{tpu_custom_call.1} parent=1 // pred_check_branch
      %54 = sbr.rel (%p52) target = $region29
    $region28: #{tpu_custom_call.1} parent=1 // pred_region
      %vm55 = vcmask 7168
      %56 = vst.msk [vmem:[#allocation2] sm:$0xff] %vm55, -inf
      %57 = vst.msk [vmem:[#allocation3] sm:$0xff] %vm55, 0.0
    $region29: #{tpu_custom_call.1} parent=1 // pred_fallthru
      _
    // Predicated region
    $region30: #{tpu_custom_call.1} parent=1 // pred_check
      %p58 = pneg %p40
    $region31: #{tpu_custom_call.1} parent=1 // pred_check_branch
      %60 = sbr.rel (%p58) target = $region33
    $region32: #{tpu_custom_call.1} parent=1 // pred_region
      %vm61 = vcmask 57344
      %62 = vst.msk [vmem:[#allocation4] sm:$0x1] %vm61, -inf
      %63 = vst.msk [vmem:[#allocation5] sm:$0x1] %vm61, 0.0
    $region33: #{tpu_custom_call.1} parent=1 // pred_fallthru
      _
    %s64 = sld [smem:[#allocation7]]
    %v65 = vld [vmem:[#allocation8] sm:$0xff]
    %v66 = vld [vmem:[#allocation11] sm:$0xff]
    %vm67 = vcmask 261120
    %v69 = vsel %vm67, %v65, 0
    %v72 = vsel %vm67, %v66, 0
    %74 = vmatprep.subr.mxu0 0.0
    %75 = vmatpush1.xpose.msra.mxu0 %v72
    %76 = vmatprep.subr.mxu0 0.0
    %77 = vmatpush1.xpose.msra.mxu0 0.0
    %78 = vmatprep.subr.mxu0 0.0
    %79 = vmatpush1.xpose.msra.mxu0 0.0
    %80 = vmatprep.subr.mxu0 0.0
    %81 = vmatpush1.xpose.msra.mxu0 0.0
    %82 = vmatprep.subr.mxu0 0.0
    %83 = vmatpush1.xpose.msra.mxu0 0.0
    %84 = vmatprep.subr.mxu0 0.0
    %85 = vmatpush1.xpose.msra.mxu0 0.0
    %86 = vmatprep.subr.mxu0 0.0
    %87 = vmatpush1.xpose.msra.mxu0 0.0
    %88 = vmatprep.subr.mxu0 0.0
    %89 = vmatpush1.xpose.msra.mxu0 0.0
    %90 = vmatprep.subr.mxu0 0.0
    %91 = vmatpush1.xpose.msra.mxu0 0.0
    %92 = vmatprep.subr.mxu0 0.0
    %93 = vmatpush1.xpose.msra.mxu0 0.0
    %94 = vmatprep.subr.mxu0 0.0
    %95 = vmatpush1.xpose.msra.mxu0 0.0
    %96 = vmatprep.subr.mxu0 0.0
    %97 = vmatpush1.xpose.msra.mxu0 0.0
    %98 = vmatprep.subr.mxu0 0.0
    %99 = vmatpush1.xpose.msra.mxu0 0.0
    %100 = vmatprep.subr.mxu0 0.0
    %101 = vmatpush1.xpose.msra.mxu0 0.0
    %102 = vmatprep.subr.mxu0 0.0
    %103 = vmatpush1.xpose.msra.mxu0 0.0
    %104 = vmatprep.subr.mxu0 0.0
    %105 = vmatpush1.xpose.msra.mxu0 0.0
    %106 = vmatprep.subr.mxu0 0.0
    %107 = vmatpush1.xpose.msra.mxu0 0.0
    %108 = vmatprep.subr.mxu0 0.0
    %109 = vmatpush1.xpose.msra.mxu0 0.0
    %110 = vmatprep.subr.mxu0 0.0
    %111 = vmatpush1.xpose.msra.mxu0 0.0
    %112 = vmatprep.subr.mxu0 0.0
    %113 = vmatpush1.xpose.msra.mxu0 0.0
    %114 = vmatprep.subr.mxu0 0.0
    %115 = vmatpush1.xpose.msra.mxu0 0.0
    %116 = vmatprep.subr.mxu0 0.0
    %117 = vmatpush1.xpose.msra.mxu0 0.0
    %118 = vmatprep.subr.mxu0 0.0
    %119 = vmatpush1.xpose.msra.mxu0 0.0
    %120 = vmatprep.subr.mxu0 0.0
    %121 = vmatpush1.xpose.msra.mxu0 0.0
    %122 = vmatprep.subr.mxu0 0.0
    %123 = vmatpush1.xpose.msra.mxu0 0.0
    %124 = vmatprep.subr.mxu0 0.0
    %125 = vmatpush1.xpose.msra.mxu0 0.0
    %126 = vmatprep.subr.mxu0 0.0
    %127 = vmatpush1.xpose.msra.mxu0 0.0
    %128 = vmatprep.subr.mxu0 0.0
    %129 = vmatpush1.xpose.msra.mxu0 0.0
    %130 = vmatprep.subr.mxu0 0.0
    %131 = vmatpush1.xpose.msra.mxu0 0.0
    %132 = vmatprep.subr.mxu0 0.0
    %133 = vmatpush1.xpose.msra.mxu0 0.0
    %134 = vmatprep.subr.mxu0 0.0
    %135 = vmatpush1.xpose.msra.mxu0 0.0
    %136 = vmatprep.subr.mxu0 0.0
    %137 = vmatpush1.xpose.msra.mxu0 0.0
    %138 = vmatprep.mubr.f32.mxu0 0.0
    %139 = vmatmul.mubr.f32.gmra.mrb[0].mxu0 %v69
    %v140 = vpop.f32.mrb[0].mxu0
    %v141 = vadd.f32 0.0, %v140
    %v142 = vpop.f32.mrb[0].mxu0
    %143 = vdwg.mxu0
    %v144 = vstv %s64
    %v145 = vmul.f32 %v141, %v144
    %v146 = vld [vmem:[#allocation2] sm:$0xff]
    %vm147 = vcmask 64512
    %v148 = vsel %vm147, %v145, -inf
    %149 = vmax.xlane.f32.xlu0 %v148
    %v150 = vpop.xlane.xlu0 %149
    %v151 = vmax.f32 %v146, %v150
    %v152 = vld [vmem:[#allocation3] sm:$0xff]
    %v153 = vsub.f32 %v146, %v151
    %v154 = vmul.f32 %v153, 1.442695
    %v155 = vpow.pop %v154
    %v156 = vmul.f32 %v152, %v155
    %158 = vset.pattern.permute.xlu0 0
    %159 = vperm.xlu0 %158, %v151
    %v160 = vpop.permute.xlu0 %159
    %v162 = vsub.f32 %v145, %v160
    %v163 = vmul.f32 %v162, 1.442695
    %v164 = vpow.pop %v163
    %v165 = vsel %vm147, %v164, 0.0
    %166 = vadd.xlane.f32.xlu0 %v165
    %v167 = vpop.xlane.xlu0 %166
    %v168 = vadd.f32 %v156, %v167
    %vm169 = vcmask 7168
    %170 = vst.msk [vmem:[#allocation3] sm:$0xff] %vm169, %v168
    %171 = vst.msk [vmem:[#allocation2] sm:$0xff] %vm169, %v151
    %v172 = vld [vmem:[#allocation4] sm:$0x1]
    %v173 = vld [vmem:[#allocation5] sm:$0x1]
    %v174 = vrot.slane %v148, 4
    %v175 = vmax.f32 %v148, %v174
    %v176 = vrot.slane %v175, 2
    %v177 = vmax.f32 %v175, %v176
    %v178 = vrot.slane %v177, 1
    %v179 = vmax.f32 %v177, %v178
    %v180 = vmax.f32 %v172, %v179
    %v181 = vsub.f32 %v172, %v180
    %v182 = vmul.f32 %v181, 1.442695
    %v183 = vpow.pop %v182
    %v184 = vmul.f32 %v173, %v183
    %v186 = vlaneseq
    %v187 = vshrl.u32 %v186, 7
    %v188 = vsub.s32 0, %v187
    %v189 = vrot.slane %v180, %v188
    %v191 = vsub.f32 %v145, %v189
    %v192 = vmul.f32 %v191, 1.442695
    %v193 = vpow.pop %v192
    %v194 = vsel %vm147, %v193, 0.0
    %v195 = vrot.slane %v194, 4
    %v196 = vadd.f32 %v194, %v195
    %v197 = vrot.slane %v196, 2
    %v198 = vadd.f32 %v196, %v197
    %v199 = vrot.slane %v198, 1
    %v200 = vadd.f32 %v198, %v199
    %v201 = vadd.f32 %v184, %v200
    %vm202 = vcmask 57344
    %203 = vst.msk [vmem:[#allocation5] sm:$0x1] %vm202, %v201
    %204 = vst.msk [vmem:[#allocation4] sm:$0x1] %vm202, %v180
    %p205 = scmp.eq.s32.totalorder 0, 0
    // Predicated region
    $region34: #{tpu_custom_call.1} parent=1 // pred_check
      %p206 = pneg %p205
    $region35: #{tpu_custom_call.1} parent=1 // pred_check_branch
      %208 = sbr.rel (%p206) target = $region37
    $region36: #{tpu_custom_call.1} parent=1 // pred_region
      %v209 = vlaneseq
      %v210 = vshrl.u32 %v209, 7
      %v211 = vlaneseq
      %v212 = vand.u32 %v211, 127
      %s213 = sld [smem:[#allocation6 + $0x2]]
      %vm214 = vcmp.eq.s32.totalorder %v210, %v212
      %v215 = vsel %vm214, %v145, 0.0
      %v216 = vsel %vm147, %v215, 0.0
      %217 = vadd.xlane.f32.xlu0 %v216
      %v218 = vpop.xlane.xlu0 %217
      %v219 = vrot.slane %v218, 4
      %v220 = vadd.f32 %v218, %v219
      %v221 = vrot.slane %v220, 2
      %v222 = vadd.f32 %v220, %v221
      %v223 = vrot.slane %v222, 1
      %v224 = vadd.f32 %v222, %v223
      %s225 = vtos %v224
      %s226 = sadd.f32 %s213, %s225
      %s227 = scalar_lea.smem [#allocation6], 2
      %228 = sst [smem:[%s227]] %s226
    $region37: #{tpu_custom_call.1} parent=1 // pred_fallthru
      _
    // Predicated region
    $region38: #{tpu_custom_call.1} parent=1 // pred_check
      %p229 = pneg %p41
    $region39: #{tpu_custom_call.1} parent=1 // pred_check_branch
      %231 = sbr.rel (%p229) target = $region41
    $region40: #{tpu_custom_call.1} parent=1 // pred_region
      %s232 = sld [smem:[#allocation6]]
      %v233 = vld [vmem:[#allocation2] sm:$0xff]
      %v234 = vld [vmem:[#allocation3] sm:$0xff]
      %v235 = vlog2.pop %v234
      %v236 = vmul.f32 %v235, 0.6931472
      %v237 = vadd.f32 %v233, %v236
      %v238 = vsel %vm169, %v237, 0.0
      %239 = vadd.xlane.f32.xlu0 %v238
      %v240 = vpop.xlane.xlu0 %239
      %v241 = vrot.slane %v240, 4
      %v242 = vadd.f32 %v240, %v241
      %v243 = vrot.slane %v242, 2
      %v244 = vadd.f32 %v242, %v243
      %v245 = vrot.slane %v244, 1
      %v246 = vadd.f32 %v244, %v245
      %s247 = vtos %v246
      %s248 = sadd.f32 %s232, %s247
      %s249 = scalar_lea.smem [#allocation6], 0
      %250 = sst [smem:[%s249]] %s248
    $region41: #{tpu_custom_call.1} parent=1 // pred_fallthru
      _
    // Predicated region
    $region42: #{tpu_custom_call.1} parent=1 // pred_check
      %p251 = pneg %p40
    $region43: #{tpu_custom_call.1} parent=1 // pred_check_branch
      %253 = sbr.rel (%p251) target = $region45
    $region44: #{tpu_custom_call.1} parent=1 // pred_region
      %s254 = sld [smem:[#allocation6 + $0x1]]
      %v255 = vld [vmem:[#allocation4] sm:$0x1]
      %v256 = vld [vmem:[#allocation5] sm:$0x1]
      %v257 = vlog2.pop %v256
      %v258 = vmul.f32 %v257, 0.6931472
      %v259 = vadd.f32 %v255, %v258
      %v260 = vsel %vm202, %v259, 0.0
      %261 = vadd.xlane.f32.xlu0 %v260
      %v262 = vpop.xlane.xlu0 %261
      %v263 = vrot.slane %v262, 4
      %v264 = vadd.f32 %v262, %v263
      %v265 = vrot.slane %v264, 2
      %v266 = vadd.f32 %v264, %v265
      %v267 = vrot.slane %v266, 1
      %v268 = vadd.f32 %v266, %v267
      %s269 = vtos %v268
      %s270 = sadd.f32 %s254, %s269
      %s271 = scalar_lea.smem [#allocation6], 1
      %272 = sst [smem:[%s271]] %s270
    $region45: #{tpu_custom_call.1} parent=1 // pred_fallthru
      _
    // Predicated region
    $region46: #{tpu_custom_call.1} parent=1 // pred_check
      _
    $region47: #{tpu_custom_call.1} parent=1 // pred_check_branch
      %274 = sbr.rel (%p42) target = $region49
    $region48: #{tpu_custom_call.1} parent=1 // pred_region
      %s275 = sld [smem:[#allocation6 + $0x2]]
      %s276 = sld [smem:[#allocation6]]
      %s277 = ssub.f32 %s276, %s275
      %s278 = smul.f32 %s277, 0.125
      %s279 = sld [smem:[#allocation6 + $0x1]]
      %s280 = ssub.f32 %s279, %s275
      %s281 = smul.f32 %s280, 0.125
      %s282 = sadd.f32 %s278, %s281
      %s283 = smul.f32 %s282, 0.5
      %s284 = scalar_lea.smem [#allocation13], 0
      %285 = sst [smem:[%s284]] %s283
      %s286 = scalar_lea.smem [#allocation13], 1
      %287 = sst [smem:[%s286]] %s278
      %s288 = scalar_lea.smem [#allocation13], 2
      %289 = sst [smem:[%s288]] %s281
    $region49: #{tpu_custom_call.1} parent=1 // pred_fallthru
      _
    // Predicated region
    $region50: #{tpu_custom_call.1} parent=1 // pred_check
      _
    $region51: #{tpu_custom_call.1} parent=1 // pred_check_branch
      %291 = sbr.rel (0) target = $region53
    $region52: #{tpu_custom_call.1} parent=1 // pred_region
      %s293 = ssub.s32 16, 16
      %294 = vsyncadd [#allocation10], %s293
      %297 = dma.smem_to_hbm [#allocation13], 16, %s3, [#allocation10]
    $region53: #{tpu_custom_call.1} parent=1 // pred_fallthru
      _
    // Predicated region
    $region54: #{tpu_custom_call.1} parent=1 // pred_check
      _
    $region55: #{tpu_custom_call.1} parent=1 // pred_check_branch
      %299 = sbr.rel (0) target = $region57
    $region56: #{tpu_custom_call.1} parent=1 // pred_region
      %300 = dma.done [#allocation10], 16
    $region57: #{tpu_custom_call.1} parent=1 // pred_fallthru
      _
    %301 = sfence
    %302 = vsyncpa [#allocation9], 1
    %303 = vsyncpa [#allocation12], 1
    %304 = vsyncpa [#allocation10], 1

</llo_original>
